<compile_context>
chip_gen: v7x
topology: tpu7x:2x2x1
jax: 0.10.0
libtpu: 0.0.40
codegen_flags: <defaults>
</compile_context>

<pallas_src>
import jax
import jax.numpy as jnp
from jax.experimental import pallas as pl
from jax.experimental.pallas import tpu as pltpu

IN_FEATURES = 120          # full2 input features (4 * 4 * 16 -> 120 path)
NUM_CLASSES = 10

C_PAD = 128                # lane-padded output (N) dim
MAX_TB = 2048              # max batch tile (rows); ~3.9 MiB double-buffered
SINGLE_BLOCK_B = 256       # at or below this, run one exact-shape block


def _round_up(x, m):
    return ((x + m - 1) // m) * m


def _relu_linear_kernel(x_ref, w_ref, b_ref, o_ref):
    # ReLU on the VPU, (tb,120)x(120,128) matmul on the MXU (f32 accumulate),
    # single bias add per output block (bias stays a (1,128) VMEM ref).
    x = jnp.maximum(x_ref[...], 0.0)
    acc = jnp.dot(x, w_ref[...], preferred_element_type=jnp.float32)
    o_ref[...] = (acc + b_ref[...]).astype(o_ref.dtype)


def prepare_params(weight, bias):
    """One-time (model-load) param prep: transpose + lane-pad the output dim.

    weight: (num_classes, 120) f32 (PyTorch layout); bias: (num_classes,).
    Returns w_pad (120, 128) f32, b_pad (1, 128) f32.  Zero padding of the
    extra output lanes is numerically exact (padded logits are sliced off).
    """
    C, F = weight.shape
    w_pad = jnp.zeros((F, C_PAD), jnp.float32).at[:, :C].set(
        jnp.transpose(weight).astype(jnp.float32))
    b_pad = jnp.zeros((1, C_PAD), jnp.float32).at[0, :C].set(
        bias.astype(jnp.float32))
    return w_pad, b_pad


def lenet5u_forward(x, w_pad, b_pad, num_classes=NUM_CLASSES):
    """x: (B, 120) f32; w_pad/b_pad from prepare_params().
    Returns (B, num_classes) f32."""
    B, F = x.shape
    x = x.astype(jnp.float32)

    if B <= SINGLE_BLOCK_B:
        # Single exact-shape block: block dims equal the full array dims, so
        # there is no padding, no ragged edge and no per-step overhead.
        tb = B
    else:
        # >= 2 blocks so the "parallel" axis splits across both v7x
        # TensorCores; capped at MAX_TB so double-buffered x+out tiles stay
        # inside every generation's scoped-VMEM default.  A ragged last block
        # is exact: matmul rows are independent and OOB output rows are
        # masked on writeback.
        tb = min(MAX_TB, _round_up(pl.cdiv(B, 2), 8))
    grid = pl.cdiv(B, tb)

    cost = pl.CostEstimate(
        flops=2 * B * F * C_PAD,
        transcendentals=0,
        bytes_accessed=(B * F + B * C_PAD + F * C_PAD + C_PAD) * 4,
    )

    out = pl.pallas_call(
        _relu_linear_kernel,
        out_shape=jax.ShapeDtypeStruct((B, C_PAD), jnp.float32),
        grid=(grid,),
        in_specs=[
            pl.BlockSpec((tb, F), lambda i: (i, 0)),      # batch-tiled x, no pad
            pl.BlockSpec((F, C_PAD), lambda i: (0, 0)),   # resident weight
            pl.BlockSpec((1, C_PAD), lambda i: (0, 0)),   # resident bias
        ],
        out_specs=pl.BlockSpec((tb, C_PAD), lambda i: (i, 0)),
        compiler_params=pltpu.CompilerParams(
            dimension_semantics=("parallel",)),   # megacore split on v7x
        cost_estimate=cost,
    )(x, w_pad, b_pad)

    return out[:, :num_classes]


if __name__ == "__main__":
    key = jax.random.PRNGKey(0)
    kx, kw = jax.random.split(key)

    B = 2
    # Deterministic synthetic parameters (module's __init__ zeroes the bias).
    x = jax.random.normal(kx, (B, IN_FEATURES), dtype=jnp.float32)
    bound = 1.0 / (IN_FEATURES ** 0.5)   # nn.Linear default uniform bound
    weight = jax.random.uniform(
        kw, (NUM_CLASSES, IN_FEATURES), dtype=jnp.float32,
        minval=-bound, maxval=bound)
    bias = jnp.zeros((NUM_CLASSES,), dtype=jnp.float32)

    # One-time parameter prep (hoisted out of the per-call hot path).
    w_pad, b_pad = prepare_params(weight, bias)

    out = lenet5u_forward(x, w_pad, b_pad)
    out = jax.block_until_ready(out)

    # Reference check in plain JAX.
    ref = jnp.maximum(x, 0.0) @ weight.T + bias
    assert out.shape == (B, NUM_CLASSES)
    assert jnp.allclose(out, ref, atol=1e-5, rtol=1e-5)

    # TODO(synk): conv1/conv2/pool/full1 layers exist in __init__ but are
    # unused by the module's forward(), so they are intentionally not lowered.
    print("KERNEL_OK")
</pallas_src>

<mosaic_0001>
module attributes {stable_mosaic.version = 11 : i64} {
  func.func @_relu_linear_kernel(%arg0: i32, %arg1: memref<2x120xf32, #tpu.memory_space<vmem>>, %arg2: memref<120x128xf32, #tpu.memory_space<vmem>>, %arg3: memref<1x128xf32, #tpu.memory_space<vmem>>, %arg4: memref<2x128xf32, #tpu.memory_space<vmem>>) attributes {dimension_semantics = [#tpu.dimension_semantics<parallel>], iteration_bounds = array<i64: 1>, scalar_prefetch = 0 : i64, scratch_operands = 0 : i64, tpu.core_type = #tpu.core_type<tc>, window_params = [{transform_indices = @transform_0, window_bounds = array<i64: 2, 120>}, {pipeline_mode = #tpu.pipeline_mode<synchronous>, transform_indices = @transform_1, window_bounds = array<i64: 120, 128>}, {pipeline_mode = #tpu.pipeline_mode<synchronous>, transform_indices = @transform_2, window_bounds = array<i64: 1, 128>}, {transform_indices = @transform_3, window_bounds = array<i64: 2, 128>}]} {
    %c0 = arith.constant 0 : index
    %c0_0 = arith.constant 0 : index
    %0 = vector.load %arg1[%c0, %c0_0] : memref<2x120xf32, #tpu.memory_space<vmem>>, vector<2x120xf32>
    %cst = arith.constant 0.000000e+00 : f32
    %1 = vector.broadcast %cst : f32 to vector<2x120xf32>
    %2 = arith.maximumf %0, %1 : vector<2x120xf32>
    %c0_1 = arith.constant 0 : index
    %c0_2 = arith.constant 0 : index
    %3 = vector.load %arg2[%c0_1, %c0_2] : memref<120x128xf32, #tpu.memory_space<vmem>>, vector<120x128xf32>
    %cst_3 = arith.constant dense<0.000000e+00> : vector<2x128xf32>
    %4 = tpu.matmul %2, %3, %cst_3 {dimension_numbers = #tpu.dot_dimension_numbers<[1], [0], [0], [1], [0, 0, 1, 1], [], []>} : vector<2x120xf32>, vector<120x128xf32>, vector<2x128xf32> -> vector<2x128xf32>
    %c0_4 = arith.constant 0 : index
    %c0_5 = arith.constant 0 : index
    %5 = vector.load %arg3[%c0_4, %c0_5] : memref<1x128xf32, #tpu.memory_space<vmem>>, vector<1x128xf32>
    %6 = vector.broadcast %5 : vector<1x128xf32> to vector<2x128xf32>
    %7 = arith.addf %4, %6 : vector<2x128xf32>
    %c0_6 = arith.constant 0 : index
    %c0_7 = arith.constant 0 : index
    %8 = vector.load %arg4[%c0_6, %c0_7] : memref<2x128xf32, #tpu.memory_space<vmem>>, vector<2x128xf32>
    tpu.vector_store %arg4[%c0_6, %c0_7], %7 {strides = array<i32>} : memref<2x128xf32, #tpu.memory_space<vmem>>, vector<2x128xf32>,
    return
  }
  func.func @transform_0(%arg0: i32) -> (i32, i32) {
    %c0_i32 = arith.constant 0 : i32
    %c0_i32_0 = arith.constant 0 : i32
    return %arg0, %c0_i32 : i32, i32
  }
  func.func @transform_1(%arg0: i32) -> (i32, i32) {
    %c0_i32 = arith.constant 0 : i32
    %c0_i32_0 = arith.constant 0 : i32
    %c0_i32_1 = arith.constant 0 : i32
    return %c0_i32, %c0_i32_0 : i32, i32
  }
  func.func @transform_2(%arg0: i32) -> (i32, i32) {
    %c0_i32 = arith.constant 0 : i32
    %c0_i32_0 = arith.constant 0 : i32
    %c0_i32_1 = arith.constant 0 : i32
    return %c0_i32, %c0_i32_0 : i32, i32
  }
  func.func @transform_3(%arg0: i32) -> (i32, i32) {
    %c0_i32 = arith.constant 0 : i32
    %c0_i32_0 = arith.constant 0 : i32
    return %arg0, %c0_i32 : i32, i32
  }
}

</mosaic_0001>

<llo_original>
// kernel: tpu_custom_call.1
$region0: #{tpu_custom_call.1}
  #allocation0 [shape = 'u32[]', space=smem, size = 0x4, offset = 0x4, fixed_abs, tag = 'smem constant byte address 0x4 - core index']
  #allocation1 [shape = 'u32[144,128]{1,0:T(1,128)}', space=vmem, size = 0x12000, scoped, tag = 'internal scratch']
  %s0 = inlined_call_operand.hbm [shape: f32[2,120], index: 0, kind: input, shape index: {}]
  %s1 = inlined_call_operand.hbm [shape: f32[120,128], index: 1, kind: input, shape index: {}]
  %s2 = inlined_call_operand.vmem [shape: f32[1,128], index: 2, kind: input, shape index: {}]
  %s3 = inlined_call_operand.hbm [shape: f32[2,128], index: 3, kind: output, shape index: {}]
  %s4 = sld [smem:[#allocation0]]
  $region30: #{tpu_custom_call.1} parent=0
    _
  %s6 = ssub.s32 1, %s4
  %s7 = scalar_select 0, %s6, %s4
  $region1: #{tpu_custom_call.1} parent=0
    #allocation2 [shape = 'u8[1024]{0}', space=vmem, size = 0x400, scoped, tag = 'input window, operand 0, single buffered']
    #allocation3 [shape = 's32[1]{0}', space=sflag, size = 0x4, scoped, tag = 'scoped memory for tpu_custom_call.1']
    #allocation4 [shape = 's32[1]{0}', space=sflag, size = 0x4, scoped, tag = 'scoped memory for tpu_custom_call.1']
    #allocation5 [shape = 'u8[61440]{0}', space=vmem, size = 0xf000, scoped, tag = 'input window, operand 1, single buffered']
    #allocation6 [shape = 's32[1]{0}', space=sflag, size = 0x4, scoped, tag = 'scoped memory for tpu_custom_call.1']
    #allocation7 [shape = 'u8[1024]{0}', space=vmem, size = 0x400, scoped, tag = 'output window, operand 0, single buffered']
    %8 = vsyncpa [#allocation3], 0
    %9 = vsyncpa [#allocation6], 0
    %10 = vsyncpa [#allocation4], 0
    // Predicated region
    $region2: #{tpu_custom_call.1} parent=1 // pred_check
      _
    $region3: #{tpu_custom_call.1} parent=1 // pred_check_branch
      %12 = sbr.rel (0) target = $region5
    $region4: #{tpu_custom_call.1} parent=1 // pred_region
      %s14 = ssub.s32 32, 32
      %15 = vsyncadd [#allocation3], %s14
      %s17 = sshll.u32 [#allocation2], 4
      %s18 = int_to_ptr.vmem [resolvable:$true] %s17
      %20 = dma.hbm_to_vmem [thread:$0]  %s0, 32, %s18, [#allocation3]
    $region5: #{tpu_custom_call.1} parent=1 // pred_fallthru
      _
    // Predicated region
    $region6: #{tpu_custom_call.1} parent=1 // pred_check
      _
    $region7: #{tpu_custom_call.1} parent=1 // pred_check_branch
      %22 = sbr.rel (0) target = $region9
    $region8: #{tpu_custom_call.1} parent=1 // pred_region
      %s24 = ssub.s32 1920, 1920
      %25 = vsyncadd [#allocation6], %s24
      %s26 = sshll.u32 [#allocation5], 4
      %s27 = int_to_ptr.vmem [resolvable:$true] %s26
      %32 = dma.hbm_to_vmem [thread:$0]  %s1, 1920, %s27, [#allocation6], 128, 128, 8
    $region9: #{tpu_custom_call.1} parent=1 // pred_fallthru
      _
    // Predicated region
    $region10: #{tpu_custom_call.1} parent=1 // pred_check
      _
    $region11: #{tpu_custom_call.1} parent=1 // pred_check_branch
      %34 = sbr.rel (0) target = $region13
    $region12: #{tpu_custom_call.1} parent=1 // pred_region
      _
    $region13: #{tpu_custom_call.1} parent=1 // pred_fallthru
      _
    // Predicated region
    $region14: #{tpu_custom_call.1} parent=1 // pred_check
      _
    $region15: #{tpu_custom_call.1} parent=1 // pred_check_branch
      %36 = sbr.rel (0) target = $region17
    $region16: #{tpu_custom_call.1} parent=1 // pred_region
      %37 = dma.done [#allocation3], 32
    $region17: #{tpu_custom_call.1} parent=1 // pred_fallthru
      _
    // Predicated region
    $region18: #{tpu_custom_call.1} parent=1 // pred_check
      _
    $region19: #{tpu_custom_call.1} parent=1 // pred_check_branch
      %39 = sbr.rel (0) target = $region21
    $region20: #{tpu_custom_call.1} parent=1 // pred_region
      %40 = dma.done [#allocation6], 1920
    $region21: #{tpu_custom_call.1} parent=1 // pred_fallthru
      _
    %v41 = vld [vmem:[#allocation2] sm:$0x3]
    %v42 = vmax.f32 %v41, 0.0
    %v43 = vld [vmem:[#allocation5] sm:$0xff]
    %v44 = vld [vmem:[#allocation5 + $0x8] sm:$0xff]
    %v45 = vld [vmem:[#allocation5 + $0x10] sm:$0xff]
    %v46 = vld [vmem:[#allocation5 + $0x18] sm:$0xff]
    %v47 = vld [vmem:[#allocation5 + $0x20] sm:$0xff]
    %v48 = vld [vmem:[#allocation5 + $0x28] sm:$0xff]
    %v49 = vld [vmem:[#allocation5 + $0x30] sm:$0xff]
    %v50 = vld [vmem:[#allocation5 + $0x38] sm:$0xff]
    %v51 = vld [vmem:[#allocation5 + $0x40] sm:$0xff]
    %v52 = vld [vmem:[#allocation5 + $0x48] sm:$0xff]
    %v53 = vld [vmem:[#allocation5 + $0x50] sm:$0xff]
    %v54 = vld [vmem:[#allocation5 + $0x58] sm:$0xff]
    %v55 = vld [vmem:[#allocation5 + $0x60] sm:$0xff]
    %v56 = vld [vmem:[#allocation5 + $0x68] sm:$0xff]
    %v57 = vld [vmem:[#allocation5 + $0x70] sm:$0xff]
    %v58 = vld [vmem:[%s2] sm:$0x1]
    %v60 = vlaneseq
    %v61 = vshrl.u32 %v60, 7
    %v62 = vsub.s32 0, %v61
    %v63 = vrot.slane %v58, %v62
    %vm65 = vcmask 982016
    %v67 = vsel %vm65, %v42, 0
    %69 = vmatprep.subr.mxu0 0.0
    %70 = vmatpush1.msra.mxu0 %v43
    %71 = vmatprep.subr.mxu0 0.0
    %72 = vmatpush1.msra.mxu0 %v44
    %73 = vmatprep.subr.mxu0 0.0
    %74 = vmatpush1.msra.mxu0 %v45
    %75 = vmatprep.subr.mxu0 0.0
    %76 = vmatpush1.msra.mxu0 %v46
    %77 = vmatprep.subr.mxu0 0.0
    %78 = vmatpush1.msra.mxu0 %v47
    %79 = vmatprep.subr.mxu0 0.0
    %80 = vmatpush1.msra.mxu0 %v48
    %81 = vmatprep.subr.mxu0 0.0
    %82 = vmatpush1.msra.mxu0 %v49
    %83 = vmatprep.subr.mxu0 0.0
    %84 = vmatpush1.msra.mxu0 %v50
    %85 = vmatprep.subr.mxu0 0.0
    %86 = vmatpush1.msra.mxu0 %v51
    %87 = vmatprep.subr.mxu0 0.0
    %88 = vmatpush1.msra.mxu0 %v52
    %89 = vmatprep.subr.mxu0 0.0
    %90 = vmatpush1.msra.mxu0 %v53
    %91 = vmatprep.subr.mxu0 0.0
    %92 = vmatpush1.msra.mxu0 %v54
    %93 = vmatprep.subr.mxu0 0.0
    %94 = vmatpush1.msra.mxu0 %v55
    %95 = vmatprep.subr.mxu0 0.0
    %96 = vmatpush1.msra.mxu0 %v56
    %97 = vmatprep.subr.mxu0 0.0
    %98 = vmatpush1.msra.mxu0 %v57
    %99 = vmatprep.subr.mxu0 0.0
    %100 = vmatpush1.msra.mxu0 0.0
    %101 = vmatprep.subr.mxu0 0.0
    %102 = vmatpush1.msra.mxu0 0.0
    %103 = vmatprep.subr.mxu0 0.0
    %104 = vmatpush1.msra.mxu0 0.0
    %105 = vmatprep.subr.mxu0 0.0
    %106 = vmatpush1.msra.mxu0 0.0
    %107 = vmatprep.subr.mxu0 0.0
    %108 = vmatpush1.msra.mxu0 0.0
    %109 = vmatprep.subr.mxu0 0.0
    %110 = vmatpush1.msra.mxu0 0.0
    %111 = vmatprep.subr.mxu0 0.0
    %112 = vmatpush1.msra.mxu0 0.0
    %113 = vmatprep.subr.mxu0 0.0
    %114 = vmatpush1.msra.mxu0 0.0
    %115 = vmatprep.subr.mxu0 0.0
    %116 = vmatpush1.msra.mxu0 0.0
    %117 = vmatprep.subr.mxu0 0.0
    %118 = vmatpush1.msra.mxu0 0.0
    %119 = vmatprep.subr.mxu0 0.0
    %120 = vmatpush1.msra.mxu0 0.0
    %121 = vmatprep.subr.mxu0 0.0
    %122 = vmatpush1.msra.mxu0 0.0
    %123 = vmatprep.subr.mxu0 0.0
    %124 = vmatpush1.msra.mxu0 0.0
    %125 = vmatprep.subr.mxu0 0.0
    %126 = vmatpush1.msra.mxu0 0.0
    %127 = vmatprep.subr.mxu0 0.0
    %128 = vmatpush1.msra.mxu0 0.0
    %129 = vmatprep.subr.mxu0 0.0
    %130 = vmatpush1.msra.mxu0 0.0
    %131 = vmatprep.subr.mxu0 0.0
    %132 = vmatpush1.msra.mxu0 0.0
    %133 = vmatprep.mubr.f32.mxu0 0.0
    %134 = vmatmul.mubr.f32.gmra.mrb[0].mxu0 %v67
    %v135 = vpop.f32.mrb[0].mxu0
    %v136 = vadd.f32 %v63, %v135
    %v137 = vpop.f32.mrb[0].mxu0
    %138 = vdwg.mxu0
    %139 = vst [vmem:[#allocation7] sm:$0x3] %v136
    // Predicated region
    $region22: #{tpu_custom_call.1} parent=1 // pred_check
      _
    $region23: #{tpu_custom_call.1} parent=1 // pred_check_branch
      %141 = sbr.rel (0) target = $region25
    $region24: #{tpu_custom_call.1} parent=1 // pred_region
      %s143 = ssub.s32 32, 32
      %144 = vsyncadd [#allocation4], %s143
      %s146 = sshll.u32 [#allocation7], 4
      %s147 = int_to_ptr.vmem [resolvable:$true] %s146
      %149 = dma.vmem_to_hbm [thread:$0]  %s147, 32, %s3, [#allocation4]
    $region25: #{tpu_custom_call.1} parent=1 // pred_fallthru
      _
    // Predicated region
    $region26: #{tpu_custom_call.1} parent=1 // pred_check
      _
    $region27: #{tpu_custom_call.1} parent=1 // pred_check_branch
      %151 = sbr.rel (0) target = $region29
    $region28: #{tpu_custom_call.1} parent=1 // pred_region
      %152 = dma.done [#allocation4], 32
    $region29: #{tpu_custom_call.1} parent=1 // pred_fallthru
      _
    %153 = vsyncpa [#allocation3], 1
    %154 = vsyncpa [#allocation6], 1
    %155 = vsyncpa [#allocation4], 1

</llo_original>
